<compile_context>
chip_gen: v5e
topology: v5e:2x2
jax: 0.10.0
libtpu: 0.0.40
codegen_flags: <defaults>
</compile_context>

<pallas_src>
from typing import NamedTuple, Any

import jax
import jax.numpy as jnp
from jax.experimental import pallas as pl
from jax.experimental.pallas import tpu as pltpu


HIDDEN = 600  # hard-coded in the PyTorch module
_VMEM_BUDGET_BYTES = 48 * 1024 * 1024   # safe on v7x (64 MiB physical VMEM)
_VMEM_LIMIT_CAP = 56 * 1024 * 1024


def _round_up(n, m):
    return ((n + m - 1) // m) * m


# ---------------------------------------------------------------------------
# Kernel
# ---------------------------------------------------------------------------
def gennet_kernel(x_ref, w1_ref, b1_ref, w2_ref, b2_ref, o_ref, acc_ref):
    """Grid = (M tiles, K tiles).  K (dim_in reduction) is innermost.

    x_ref  : (bm, tk)       bf16   current (m, k) tile of the input
    w1_ref : (tk, H_pad)    bf16   current K tile of W1 (streamed)
    b1_ref : (1, H_pad)     f32    resident
    w2_ref : (H_pad, N_pad) bf16   resident
    b2_ref : (1, N_pad)     f32    resident
    o_ref  : (bm, N_pad)           output tile for this m (resident across k)
    acc_ref: (bm, H_pad)    f32    hidden-layer accumulator (VMEM scratch)
    """
    k = pl.program_id(1)

    @pl.when(k == 0)
    def _():
        acc_ref[...] = jnp.zeros_like(acc_ref)

    # Partial product of the first layer: fp32 accumulation of bf16 inputs.
    acc_ref[...] += jnp.dot(x_ref[...], w1_ref[...],
                            preferred_element_type=jnp.float32)

    @pl.when(k == pl.num_programs(1) - 1)
    def _():
        # Finish layer 1: bias + ReLU (VPU, fp32).
        h = jnp.maximum(acc_ref[...] + b1_ref[...], 0.0)
        # Layer 2 on the MXU (bf16 in, fp32 accumulate), bias + ReLU.
        out = jnp.dot(h.astype(w2_ref.dtype), w2_ref[...],
                      preferred_element_type=jnp.float32)
        out = jnp.maximum(out + b2_ref[...], 0.0)
        o_ref[...] = out.astype(o_ref.dtype)


# ---------------------------------------------------------------------------
# Parameter preparation (done ONCE, outside the hot path)
# ---------------------------------------------------------------------------
class GenNetParams(NamedTuple):
    w1p: jax.Array          # (k_pad, h_pad) compute_dtype
    b1p: jax.Array          # (1, h_pad)     f32
    w2p: jax.Array          # (h_pad, n_pad) compute_dtype
    b2p: jax.Array          # (1, n_pad)     f32
    dim_in: int
    dim_out: int
    k_pad: int
    h_pad: int
    n_pad: int
    tk: int
    compute_dtype: Any


def prepare_gennet_params(w1, b1, w2, b2, *, tk=4096,
                          compute_dtype=jnp.bfloat16):
    """Pad + cast weights once so gennet_forward never re-reads them in f32.

    w1: (dim_in, 600), b1: (600,) or (1,600), w2: (600, dim_out), b2 likewise.
    Padding is numerically inert (zero weights/bias, relu(0)=0, zero W2 rows).
    """
    dim_in, hidden = w1.shape
    assert hidden == HIDDEN, f"fc1 must have {HIDDEN} output features"
    dim_out = w2.shape[1]

    h_pad = _round_up(HIDDEN, 128)                     # 600 -> 640
    n_pad = _round_up(dim_out, 128)                    # lane-dense output
    tk = _round_up(max(128, min(tk, _round_up(dim_in, 128))), 128)
    k_pad = _round_up(dim_in, tk)

    w1p = jnp.zeros((k_pad, h_pad), compute_dtype
                    ).at[:dim_in, :HIDDEN].set(w1.astype(compute_dtype))
    b1p = jnp.zeros((1, h_pad), jnp.float32
                    ).at[:, :HIDDEN].set(b1.reshape(1, -1).astype(jnp.float32))
    w2p = jnp.zeros((h_pad, n_pad), compute_dtype
                    ).at[:HIDDEN, :dim_out].set(w2.astype(compute_dtype))
    b2p = jnp.zeros((1, n_pad), jnp.float32
                    ).at[:, :dim_out].set(b2.reshape(1, -1).astype(jnp.float32))

    return GenNetParams(w1p, b1p, w2p, b2p, dim_in, dim_out,
                        k_pad, h_pad, n_pad, tk, compute_dtype)


def _vmem_usage(bm, tk, h_pad, n_pad, cbytes, obytes, x_bufs, w1_bufs):
    return (x_bufs * bm * tk * cbytes          # streamed x tiles
            + w1_bufs * tk * h_pad * cbytes    # streamed W1 tiles
            + 2 * h_pad * n_pad * cbytes       # W2 (resident, counted x2)
            + bm * h_pad * 4                   # fp32 accumulator scratch
            + 2 * bm * n_pad * max(obytes, 4)  # output tile buffers
            + 4 * (h_pad + n_pad) * 4)         # biases


# ---------------------------------------------------------------------------
# Forward
# ---------------------------------------------------------------------------
def gennet_forward(x, params: GenNetParams, *, bm=None, out_dtype=None,
                   deep_prefetch=False,
                   vmem_budget_bytes=_VMEM_BUDGET_BYTES):
    """Fused two-layer MLP forward.  x: (B, dim_in) -> (B, dim_out)."""
    B, dim_in = x.shape
    assert dim_in == params.dim_in
    out_dtype = out_dtype if out_dtype is not None else x.dtype

    k_pad, h_pad, n_pad = params.k_pad, params.h_pad, params.n_pad
    tk = params.tk
    cdtype = params.compute_dtype
    cbytes = jnp.dtype(cdtype).itemsize
    obytes = jnp.dtype(out_dtype).itemsize

    # --- M tiling: one M tile (grid_m == 1) whenever the batch allows, so
    # --- W1 streams from HBM exactly once.  bf16 sublane pack => multiple of 16.
    if bm is None:
        bm = min(_round_up(B, 16), 1024)
    bm = max(16, _round_up(bm, 16))

    x_bufs = 3 if deep_prefetch else 2
    w1_bufs = 3 if deep_prefetch else 2

    # --- Fit the tiles into the VMEM budget (v7x has only 64 MiB physical):
    # --- shrink tk first (halving, keeping lane alignment), then bm.
    while (_vmem_usage(bm, tk, h_pad, n_pad, cbytes, obytes, x_bufs, w1_bufs)
           > vmem_budget_bytes and tk >= 1024
           and (tk // 2) % 128 == 0 and k_pad % (tk // 2) == 0):
        tk //= 2
    while (_vmem_usage(bm, tk, h_pad, n_pad, cbytes, obytes, x_bufs, w1_bufs)
           > vmem_budget_bytes and bm > 16):
        bm = max(16, _round_up(bm // 2, 16))

    b_pad = _round_up(B, bm)
    grid_m = b_pad // bm
    grid_k = k_pad // tk

    # --- Per-call input padding (only x; weights are already padded/cast).
    if (B, dim_in) == (b_pad, k_pad):
        xp = x.astype(cdtype)
    else:
        xp = jnp.zeros((b_pad, k_pad), cdtype
                       ).at[:B, :dim_in].set(x.astype(cdtype))

    # --- Specs (optionally deeper prefetch on the two streamed operands).
    if deep_prefetch:
        x_spec = pl.BlockSpec((bm, tk), lambda m, k: (m, k),
                              pipeline_mode=pl.Buffered(3))
        w1_spec = pl.BlockSpec((tk, h_pad), lambda m, k: (k, 0),
                               pipeline_mode=pl.Buffered(3))
    else:
        x_spec = pl.BlockSpec((bm, tk), lambda m, k: (m, k))
        w1_spec = pl.BlockSpec((tk, h_pad), lambda m, k: (k, 0))

    flops = 2 * b_pad * k_pad * h_pad + 2 * b_pad * h_pad * n_pad
    bytes_accessed = int(
        b_pad * k_pad * cbytes                    # x (streamed once)
        + grid_m * k_pad * h_pad * cbytes         # W1 (streamed per M tile)
        + grid_m * h_pad * n_pad * cbytes         # W2
        + (h_pad + n_pad) * 4                     # biases
        + b_pad * n_pad * obytes)                 # output

    usage = _vmem_usage(bm, tk, h_pad, n_pad, cbytes, obytes, x_bufs, w1_bufs)
    vmem_limit = int(min(max(usage + (8 << 20), 32 << 20), _VMEM_LIMIT_CAP))

    out_p = pl.pallas_call(
        gennet_kernel,
        out_shape=jax.ShapeDtypeStruct((b_pad, n_pad), out_dtype),
        grid_spec=pltpu.PrefetchScalarGridSpec(
            num_scalar_prefetch=0,
            grid=(grid_m, grid_k),
            in_specs=[
                x_spec,                                               # x
                w1_spec,                                              # W1 (stream)
                pl.BlockSpec((1, h_pad), lambda m, k: (0, 0)),        # b1
                pl.BlockSpec((h_pad, n_pad), lambda m, k: (0, 0)),    # W2
                pl.BlockSpec((1, n_pad), lambda m, k: (0, 0)),        # b2
            ],
            out_specs=pl.BlockSpec((bm, n_pad), lambda m, k: (m, 0)),
            scratch_shapes=[pltpu.VMEM((bm, h_pad), jnp.float32)],
        ),
        compiler_params=pltpu.CompilerParams(
            dimension_semantics=("parallel", "arbitrary"),
            vmem_limit_bytes=vmem_limit),
        cost_estimate=pl.CostEstimate(
            flops=flops, transcendentals=0, bytes_accessed=bytes_accessed),
    )(xp, params.w1p, params.b1p, params.w2p, params.b2p)

    return out_p[:B, :params.dim_out]


# ---------------------------------------------------------------------------
# Init / reference
# ---------------------------------------------------------------------------
def init_gennet_params(key, dim_in, dim_out, dtype=jnp.float32):
    """Deterministic init mimicking PyTorch nn.Linear default:
    U(-1/sqrt(fan_in), 1/sqrt(fan_in)) for both weight and bias."""
    k1, k2, k3, k4 = jax.random.split(key, 4)
    bound1 = 1.0 / (dim_in ** 0.5)
    w1 = jax.random.uniform(k1, (dim_in, HIDDEN), dtype, -bound1, bound1)
    b1 = jax.random.uniform(k2, (1, HIDDEN), dtype, -bound1, bound1)
    bound2 = 1.0 / (HIDDEN ** 0.5)
    w2 = jax.random.uniform(k3, (HIDDEN, dim_out), dtype, -bound2, bound2)
    b2 = jax.random.uniform(k4, (1, dim_out), dtype, -bound2, bound2)
    return w1, b1, w2, b2


def gennet_reference(x, w1, b1, w2, b2):
    """Pure-JAX reference matching the kernel's bf16-in / fp32-accumulate
    numerics (inputs and the hidden activation are rounded to bf16)."""
    f32 = jnp.float32
    xb = x.astype(jnp.bfloat16).astype(f32)
    w1b = w1.astype(jnp.bfloat16).astype(f32)
    h = jnp.maximum(xb @ w1b + b1.astype(f32), 0.0)
    hb = h.astype(jnp.bfloat16).astype(f32)
    w2b = w2.astype(jnp.bfloat16).astype(f32)
    return jnp.maximum(hb @ w2b + b2.astype(f32), 0.0)


if __name__ == "__main__":
    key = jax.random.PRNGKey(0)
    k_x, k_p = jax.random.split(key)

    # Small shapes, chosen to exercise the reduction pipeline:
    #   dim_in=300, tk=128 -> 3 K (reduction) steps with fp32 accumulation
    #   B=24 -> bm auto-picks 32 => grid_m == 1 (W1 streamed exactly once)
    B, dim_in, dim_out = 24, 300, 16
    x = jax.random.normal(k_x, (B, dim_in), jnp.float32)
    w1, b1, w2, b2 = init_gennet_params(k_p, dim_in, dim_out)

    # Weight pad + bf16 cast done once, outside the per-call forward path.
    params = prepare_gennet_params(w1, b1, w2, b2, tk=128)

    out = gennet_forward(x, params)
    out = jax.block_until_ready(out)

    ref = gennet_reference(x, w1, b1, w2, b2)
    assert out.shape == (B, dim_out)
    assert jnp.allclose(out, ref, atol=1e-3, rtol=1e-3), "mismatch vs reference"

    print("KERNEL_OK")
</pallas_src>

<mosaic_0001>
module attributes {stable_mosaic.version = 11 : i64} {
  func.func @gennet_kernel(%arg0: i32, %arg1: i32, %arg2: memref<32x128xbf16, #tpu.memory_space<vmem>>, %arg3: memref<128x640xbf16, #tpu.memory_space<vmem>>, %arg4: memref<1x640xf32, #tpu.memory_space<vmem>>, %arg5: memref<640x128xbf16, #tpu.memory_space<vmem>>, %arg6: memref<1x128xf32, #tpu.memory_space<vmem>>, %arg7: memref<32x128xf32, #tpu.memory_space<vmem>>, %arg8: memref<32x640xf32, #tpu.memory_space<vmem>>) attributes {dimension_semantics = [#tpu.dimension_semantics<parallel>, #tpu.dimension_semantics<arbitrary>], iteration_bounds = array<i64: 1, 3>, scalar_prefetch = 0 : i64, scratch_operands = 1 : i64, tpu.core_type = #tpu.core_type<tc>, window_params = [{transform_indices = @transform_0, window_bounds = array<i64: 32, 128>}, {transform_indices = @transform_1, window_bounds = array<i64: 128, 640>}, {pipeline_mode = #tpu.pipeline_mode<synchronous>, transform_indices = @transform_2, window_bounds = array<i64: 1, 640>}, {pipeline_mode = #tpu.pipeline_mode<synchronous>, transform_indices = @transform_3, window_bounds = array<i64: 640, 128>}, {pipeline_mode = #tpu.pipeline_mode<synchronous>, transform_indices = @transform_4, window_bounds = array<i64: 1, 128>}, {transform_indices = @transform_5, window_bounds = array<i64: 32, 128>}]} {
    %c0_i32 = arith.constant 0 : i32
    %0 = arith.cmpi eq, %arg1, %c0_i32 : i32
    %1 = arith.extui %0 : i1 to i32
    %c0_i32_0 = arith.constant 0 : i32
    %2 = arith.cmpi ne, %1, %c0_i32_0 : i32
    scf.if %2 {
      %cst_9 = arith.constant 0.000000e+00 : f32
      %12 = vector.broadcast %cst_9 : f32 to vector<32x640xf32>
      %c0_10 = arith.constant 0 : index
      %c0_11 = arith.constant 0 : index
      %13 = vector.load %arg8[%c0_10, %c0_11] : memref<32x640xf32, #tpu.memory_space<vmem>>, vector<32x640xf32>
      tpu.vector_store %arg8[%c0_10, %c0_11], %12 {strides = array<i32>} : memref<32x640xf32, #tpu.memory_space<vmem>>, vector<32x640xf32>,
    } else {
    }
    %c0 = arith.constant 0 : index
    %c0_1 = arith.constant 0 : index
    %3 = vector.load %arg8[%c0, %c0_1] : memref<32x640xf32, #tpu.memory_space<vmem>>, vector<32x640xf32>
    %c0_2 = arith.constant 0 : index
    %c0_3 = arith.constant 0 : index
    %4 = vector.load %arg2[%c0_2, %c0_3] : memref<32x128xbf16, #tpu.memory_space<vmem>>, vector<32x128xbf16>
    %c0_4 = arith.constant 0 : index
    %c0_5 = arith.constant 0 : index
    %5 = vector.load %arg3[%c0_4, %c0_5] : memref<128x640xbf16, #tpu.memory_space<vmem>>, vector<128x640xbf16>
    %cst = arith.constant dense<0.000000e+00> : vector<32x640xf32>
    %6 = tpu.matmul %4, %5, %cst {dimension_numbers = #tpu.dot_dimension_numbers<[1], [0], [0], [1], [0, 0, 1, 1], [], []>} : vector<32x128xbf16>, vector<128x640xbf16>, vector<32x640xf32> -> vector<32x640xf32>
    %7 = arith.addf %3, %6 : vector<32x640xf32>
    %c0_6 = arith.constant 0 : index
    %c0_7 = arith.constant 0 : index
    %8 = vector.load %arg8[%c0_6, %c0_7] : memref<32x640xf32, #tpu.memory_space<vmem>>, vector<32x640xf32>
    tpu.vector_store %arg8[%c0_6, %c0_7], %7 {strides = array<i32>} : memref<32x640xf32, #tpu.memory_space<vmem>>, vector<32x640xf32>,
    %c2_i32 = arith.constant 2 : i32
    %9 = arith.cmpi eq, %arg1, %c2_i32 : i32
    %10 = arith.extui %9 : i1 to i32
    %c0_i32_8 = arith.constant 0 : i32
    %11 = arith.cmpi ne, %10, %c0_i32_8 : i32
    scf.if %11 {
      %c0_9 = arith.constant 0 : index
      %c0_10 = arith.constant 0 : index
      %12 = vector.load %arg8[%c0_9, %c0_10] : memref<32x640xf32, #tpu.memory_space<vmem>>, vector<32x640xf32>
      %c0_11 = arith.constant 0 : index
      %c0_12 = arith.constant 0 : index
      %13 = vector.load %arg4[%c0_11, %c0_12] : memref<1x640xf32, #tpu.memory_space<vmem>>, vector<1x640xf32>
      %14 = vector.broadcast %13 : vector<1x640xf32> to vector<32x640xf32>
      %15 = arith.addf %12, %14 : vector<32x640xf32>
      %cst_13 = arith.constant 0.000000e+00 : f32
      %16 = vector.broadcast %cst_13 : f32 to vector<32x640xf32>
      %17 = arith.maximumf %15, %16 : vector<32x640xf32>
      %18 = arith.truncf %17 : vector<32x640xf32> to vector<32x640xbf16>
      %c0_14 = arith.constant 0 : index
      %c0_15 = arith.constant 0 : index
      %19 = vector.load %arg5[%c0_14, %c0_15] : memref<640x128xbf16, #tpu.memory_space<vmem>>, vector<640x128xbf16>
      %cst_16 = arith.constant dense<0.000000e+00> : vector<32x128xf32>
      %20 = tpu.matmul %18, %19, %cst_16 {dimension_numbers = #tpu.dot_dimension_numbers<[1], [0], [0], [1], [0, 0, 1, 1], [], []>} : vector<32x640xbf16>, vector<640x128xbf16>, vector<32x128xf32> -> vector<32x128xf32>
      %c0_17 = arith.constant 0 : index
      %c0_18 = arith.constant 0 : index
      %21 = vector.load %arg6[%c0_17, %c0_18] : memref<1x128xf32, #tpu.memory_space<vmem>>, vector<1x128xf32>
      %22 = vector.broadcast %21 : vector<1x128xf32> to vector<32x128xf32>
      %23 = arith.addf %20, %22 : vector<32x128xf32>
      %cst_19 = arith.constant 0.000000e+00 : f32
      %24 = vector.broadcast %cst_19 : f32 to vector<32x128xf32>
      %25 = arith.maximumf %23, %24 : vector<32x128xf32>
      %c0_20 = arith.constant 0 : index
      %c0_21 = arith.constant 0 : index
      %26 = vector.load %arg7[%c0_20, %c0_21] : memref<32x128xf32, #tpu.memory_space<vmem>>, vector<32x128xf32>
      tpu.vector_store %arg7[%c0_20, %c0_21], %25 {strides = array<i32>} : memref<32x128xf32, #tpu.memory_space<vmem>>, vector<32x128xf32>,
    } else {
    }
    return
  }
  func.func @transform_0(%arg0: i32, %arg1: i32) -> (i32, i32) {
    %c0_i32 = arith.constant 0 : i32
    return %arg0, %arg1 : i32, i32
  }
  func.func @transform_1(%arg0: i32, %arg1: i32) -> (i32, i32) {
    %c0_i32 = arith.constant 0 : i32
    %c0_i32_0 = arith.constant 0 : i32
    return %arg1, %c0_i32 : i32, i32
  }
  func.func @transform_2(%arg0: i32, %arg1: i32) -> (i32, i32) {
    %c0_i32 = arith.constant 0 : i32
    %c0_i32_0 = arith.constant 0 : i32
    %c0_i32_1 = arith.constant 0 : i32
    return %c0_i32, %c0_i32_0 : i32, i32
  }
  func.func @transform_3(%arg0: i32, %arg1: i32) -> (i32, i32) {
    %c0_i32 = arith.constant 0 : i32
    %c0_i32_0 = arith.constant 0 : i32
    %c0_i32_1 = arith.constant 0 : i32
    return %c0_i32, %c0_i32_0 : i32, i32
  }
  func.func @transform_4(%arg0: i32, %arg1: i32) -> (i32, i32) {
    %c0_i32 = arith.constant 0 : i32
    %c0_i32_0 = arith.constant 0 : i32
    %c0_i32_1 = arith.constant 0 : i32
    return %c0_i32, %c0_i32_0 : i32, i32
  }
  func.func @transform_5(%arg0: i32, %arg1: i32) -> (i32, i32) {
    %c0_i32 = arith.constant 0 : i32
    %c0_i32_0 = arith.constant 0 : i32
    return %arg0, %c0_i32 : i32, i32
  }
}

</mosaic_0001>

<llo_original>
// kernel: tpu_custom_call.1
$region0: #{tpu_custom_call.1}
  #allocation0 [shape = 'u32[]', space=smem, size = 0x4, offset = 0x4, fixed_abs, tag = 'smem constant byte address 0x4 - core index']
  #allocation1 [shape = 'u32[72,128]{1,0:T(1,128)}', space=vmem, size = 0x9000, scoped, tag = 'internal scratch']
  #allocation2 [shape = 'f32[32,640]{1,0:T(8,128)}', space=vmem, size = 0x14000, scoped, tag = 'scratch operand']
  %s0 = inlined_call_operand.hbm [shape: bf16[32,384], index: 0, kind: input, shape index: {}]
  %s1 = inlined_call_operand.hbm [shape: bf16[384,640], index: 1, kind: input, shape index: {}]
  %s2 = inlined_call_operand.hbm [shape: f32[1,640], index: 2, kind: input, shape index: {}]
  %s3 = inlined_call_operand.hbm [shape: bf16[640,128], index: 3, kind: input, shape index: {}]
  %s4 = inlined_call_operand.vmem [shape: f32[1,128], index: 4, kind: input, shape index: {}]
  %s5 = inlined_call_operand.hbm [shape: f32[32,128], index: 5, kind: output, shape index: {}]
  %s6 = sld [smem:[#allocation0]]
  $region77: #{tpu_custom_call.1} parent=0
    _
  %s8 = ssub.s32 1, %s6
  %s9 = scalar_select 0, %s8, %s6
  $region1: #{tpu_custom_call.1} parent=0
    #allocation3 [shape = 'u8[16384]{0}', space=vmem, size = 0x4000, scoped, tag = 'input window, operand 0']
    #allocation4 [shape = 's32[2]{0}', space=sflag, size = 0x8, scoped, tag = 'scoped memory for tpu_custom_call.1']
    #allocation5 [shape = 's32[2]{0}', space=sflag, size = 0x8, scoped, tag = 'scoped memory for tpu_custom_call.1']
    #allocation6 [shape = 'u8[327680]{0}', space=vmem, size = 0x50000, scoped, tag = 'input window, operand 1']
    #allocation7 [shape = 's32[2]{0}', space=sflag, size = 0x8, scoped, tag = 'scoped memory for tpu_custom_call.1']
    #allocation8 [shape = 'u8[2560]{0}', space=vmem, size = 0xc00, scoped, tag = 'input window, operand 2, single buffered']
    #allocation9 [shape = 'u8[163840]{0}', space=vmem, size = 0x28000, scoped, tag = 'input window, operand 3, single buffered']
    #allocation10 [shape = 's32[1]{0}', space=sflag, size = 0x4, scoped, tag = 'scoped memory for tpu_custom_call.1']
    #allocation11 [shape = 'u8[16384]{0}', space=vmem, size = 0x4000, scoped, tag = 'output window, operand 0, single buffered']
    %10 = vsyncpa [#allocation4], 0
    %s11 = scalar_lea.sflag [#allocation4], 1
    %12 = vsyncpa %s11, 0
    %13 = vsyncpa [#allocation7], 0
    %s14 = scalar_lea.sflag [#allocation7], 1
    %15 = vsyncpa %s14, 0
    %16 = vsyncpa [#allocation10], 0
    %17 = vsyncpa [#allocation5], 0
    loop: start=0, step=1, limit=5
    $region2: #{tpu_custom_call.1} parent=1 // loop_pre_header
      _
    $region3: #{tpu_custom_call.1} parent=1 // loop_header
      %s19 = sphi 0, %s23
      %p20 = scmp.ge.s32.totalorder %s19, 5
      %s26 = sphi 0, %s38
      %s27 = sphi 0, %s34
      %s28 = sphi 0, %s26
      %s29 = sphi 0, %s27
      %s30 = sphi 0, %s28
      %s31 = sphi 0, %s29
      %s43 = sphi 0, %s45
      %s46 = sphi 0, %s43
      %s47 = sphi 0, %s46
      %s63 = sphi 0, %s47
      %s69 = sphi 0, %s71
      %s72 = sphi 0, %s69
      %s73 = sphi 0, %s72
      %s89 = sphi 0, %s73
      %s93 = sphi 0, %s93
      %s95 = sphi 0, %s93
      %s96 = sphi 0, %s95
      %s110 = sphi 0, %s96
      %s114 = sphi 0, %s114
      %s116 = sphi 0, %s114
      %s117 = sphi 0, %s116
      %s131 = sphi 0, %s117
      %s135 = sphi 0, %s135
      %s137 = sphi 0, %s135
      %s138 = sphi 0, %s137
      %s152 = sphi 0, %s138
      %s158 = sphi 0, %s160
      %s161 = sphi 0, %s158
      %s162 = sphi 0, %s161
      %s178 = sphi 0, %s162
    $region4: #{tpu_custom_call.1} parent=1 // loop_header_branch
      %22 = sbr.rel (%p20) target = $region8
    $region5: #{tpu_custom_call.1} parent=1 // loop_body
      %s24 = ssub.s32 %s19, 1
      %s25 = ssub.s32 %s19, 2
      %s32 = sadd.s32 1, %s27
      %p33 = scmp.ge.s32.totalorder %s32, 3
      %s34 = scalar_select %p33, 0, %s32
      %s35 = sadd.s32 1, %s26
      %s36 = scalar_select %p33, %s35, %s26
      %p37 = scmp.ge.s32.totalorder %s36, 1
      %s38 = scalar_select %p37, 0, %s36
      %s39 = ssub.s32 %s26, %s38
      %s40 = ssub.s32 %s27, %s34
      %s41 = sor.u32 %s39, %s40
      %p42 = scmp.eq.s32.totalorder %s41, 0
      %s44 = sadd.s32 %s43, 1
      %s45 = scalar_select %p42, %s43, %s44
      %p48 = pneg %p42
      %p49 = scmp.eq.s32.totalorder %s19, 2
      %p50 = por %p48, %p49
      %p51 = scmp.ne.s32.totalorder %s43, %s46
      %p52 = scmp.eq.s32.totalorder %s19, 0
      %p53 = por %p51, %p52
      %p54 = scmp.ne.s32.totalorder %s43, %s46
      %p55 = scmp.eq.s32.totalorder %s24, 2
      %p56 = por %p54, %p55
      %p57 = scmp.ne.s32.totalorder %s46, %s47
      %p58 = scmp.eq.s32.totalorder %s24, 0
      %p59 = por %p57, %p58
      %p60 = scmp.ne.s32.totalorder %s46, %s47
      %p61 = scmp.eq.s32.totalorder %s25, 2
      %p62 = por %p60, %p61
      %p64 = scmp.ne.s32.totalorder %s47, %s63
      %p65 = scmp.eq.s32.totalorder %s25, 0
      %p66 = por %p64, %p65
      %s67 = ssub.s32 %s27, %s34
      %p68 = scmp.eq.s32.totalorder %s67, 0
      %s70 = sadd.s32 %s69, 1
      %s71 = scalar_select %p68, %s69, %s70
      %p74 = pneg %p68
      %p75 = scmp.eq.s32.totalorder %s19, 2
      %p76 = por %p74, %p75
      %p77 = scmp.ne.s32.totalorder %s69, %s72
      %p78 = scmp.eq.s32.totalorder %s19, 0
      %p79 = por %p77, %p78
      %p80 = scmp.ne.s32.totalorder %s69, %s72
      %p81 = scmp.eq.s32.totalorder %s24, 2
      %p82 = por %p80, %p81
      %p83 = scmp.ne.s32.totalorder %s72, %s73
      %p84 = scmp.eq.s32.totalorder %s24, 0
      %p85 = por %p83, %p84
      %p86 = scmp.ne.s32.totalorder %s72, %s73
      %p87 = scmp.eq.s32.totalorder %s25, 2
      %p88 = por %p86, %p87
      %p90 = scmp.ne.s32.totalorder %s73, %s89
      %p91 = scmp.eq.s32.totalorder %s25, 0
      %p92 = por %p90, %p91
      %s94 = sadd.s32 %s93, 1
      %p97 = scmp.eq.s32.totalorder %s19, 2
      %p98 = scmp.ne.s32.totalorder %s93, %s95
      %p99 = scmp.eq.s32.totalorder %s19, 0
      %p100 = por %p98, %p99
      %p101 = scmp.ne.s32.totalorder %s93, %s95
      %p102 = scmp.eq.s32.totalorder %s24, 2
      %p103 = por %p101, %p102
      %p104 = scmp.ne.s32.totalorder %s95, %s96
      %p105 = scmp.eq.s32.totalorder %s24, 0
      %p106 = por %p104, %p105
      %p107 = scmp.ne.s32.totalorder %s95, %s96
      %p108 = scmp.eq.s32.totalorder %s25, 2
      %p109 = por %p107, %p108
      %p111 = scmp.ne.s32.totalorder %s96, %s110
      %p112 = scmp.eq.s32.totalorder %s25, 0
      %p113 = por %p111, %p112
      %s115 = sadd.s32 %s114, 1
      %p118 = scmp.eq.s32.totalorder %s19, 2
      %p119 = scmp.ne.s32.totalorder %s114, %s116
      %p120 = scmp.eq.s32.totalorder %s19, 0
      %p121 = por %p119, %p120
      %p122 = scmp.ne.s32.totalorder %s114, %s116
      %p123 = scmp.eq.s32.totalorder %s24, 2
      %p124 = por %p122, %p123
      %p125 = scmp.ne.s32.totalorder %s116, %s117
      %p126 = scmp.eq.s32.totalorder %s24, 0
      %p127 = por %p125, %p126
      %p128 = scmp.ne.s32.totalorder %s116, %s117
      %p129 = scmp.eq.s32.totalorder %s25, 2
      %p130 = por %p128, %p129
      %p132 = scmp.ne.s32.totalorder %s117, %s131
      %p133 = scmp.eq.s32.totalorder %s25, 0
      %p134 = por %p132, %p133
      %s136 = sadd.s32 %s135, 1
      %p139 = scmp.eq.s32.totalorder %s19, 2
      %p140 = scmp.ne.s32.totalorder %s135, %s137
      %p141 = scmp.eq.s32.totalorder %s19, 0
      %p142 = por %p140, %p141
      %p143 = scmp.ne.s32.totalorder %s135, %s137
      %p144 = scmp.eq.s32.totalorder %s24, 2
      %p145 = por %p143, %p144
      %p146 = scmp.ne.s32.totalorder %s137, %s138
      %p147 = scmp.eq.s32.totalorder %s24, 0
      %p148 = por %p146, %p147
      %p149 = scmp.ne.s32.totalorder %s137, %s138
      %p150 = scmp.eq.s32.totalorder %s25, 2
      %p151 = por %p149, %p150
      %p153 = scmp.ne.s32.totalorder %s138, %s152
      %p154 = scmp.eq.s32.totalorder %s25, 0
      %p155 = por %p153, %p154
      %s156 = ssub.s32 %s26, %s38
      %p157 = scmp.eq.s32.totalorder %s156, 0
      %s159 = sadd.s32 %s158, 1
      %s160 = scalar_select %p157, %s158, %s159
      %p163 = pneg %p157
      %p164 = scmp.eq.s32.totalorder %s19, 2
      %p165 = por %p163, %p164
      %p166 = scmp.ne.s32.totalorder %s158, %s161
      %p167 = scmp.eq.s32.totalorder %s19, 0
      %p168 = por %p166, %p167
      %p169 = scmp.ne.s32.totalorder %s158, %s161
      %p170 = scmp.eq.s32.totalorder %s24, 2
      %p171 = por %p169, %p170
      %p172 = scmp.ne.s32.totalorder %s161, %s162
      %p173 = scmp.eq.s32.totalorder %s24, 0
      %p174 = por %p172, %p173
      %p175 = scmp.ne.s32.totalorder %s161, %s162
      %p176 = scmp.eq.s32.totalorder %s25, 2
      %p177 = por %p175, %p176
      %p179 = scmp.ne.s32.totalorder %s162, %s178
      %p180 = scmp.eq.s32.totalorder %s25, 0
      %p181 = por %p179, %p180
      %p182 = scmp.le.s32.totalorder 1, %s19
      %p183 = scmp.lt.s32.totalorder %s19, 4
      %p184 = pnand %p182, %p183
      %p185 = pneg %p184
      // Predicated region
      $region9: #{tpu_custom_call.1} parent=5 // pred_check
        _
      $region10: #{tpu_custom_call.1} parent=5 // pred_check_branch
        %187 = sbr.rel (%p184) target = $region12
      $region11: #{tpu_custom_call.1} parent=5 // pred_region
        %s188 = ssub.s32 %s19, 1
        // Predicated region
        $region13: #{tpu_custom_call.1} parent=11 // pred_check
          %p189 = pneg %p106
        $region14: #{tpu_custom_call.1} parent=11 // pred_check_branch
          %191 = sbr.rel (%p189) target = $region16
        $region15: #{tpu_custom_call.1} parent=11 // pred_region
          %193 = vsyncadd [#allocation7], 0
          %s195 = sshll.u32 %s2, 4
          %s196 = int_to_ptr.hbm [resolvable:$true] %s195
          %s197 = sshll.u32 [#allocation8], 4
          %s198 = int_to_ptr.vmem [resolvable:$true] %s197
          %200 = dma.hbm_to_vmem [thread:$0]  %s196, 80, %s198, [#allocation7]
        $region16: #{tpu_custom_call.1} parent=11 // pred_fallthru
          _
        // Predicated region
        $region17: #{tpu_custom_call.1} parent=11 // pred_check
          %p201 = pneg %p127
        $region18: #{tpu_custom_call.1} parent=11 // pred_check_branch
          %203 = sbr.rel (%p201) target = $region20
        $region19: #{tpu_custom_call.1} parent=11 // pred_region
          %205 = vsyncadd [#allocation10], 0
          %s206 = sshll.u32 %s3, 4
          %s207 = int_to_ptr.hbm [resolvable:$true] %s206
          %s208 = sshll.u32 [#allocation9], 4
          %s209 = int_to_ptr.vmem [resolvable:$true] %s208
          %214 = dma.hbm_to_vmem [thread:$0]  %s207, 5120, %s209, [#allocation10], 64, 64, 4
        $region20: #{tpu_custom_call.1} parent=11 // pred_fallthru
          _
        // Predicated region
        $region21: #{tpu_custom_call.1} parent=11 // pred_check
          %p215 = pneg %p148
        $region22: #{tpu_custom_call.1} parent=11 // pred_check_branch
          %217 = sbr.rel (%p215) target = $region24
        $region23: #{tpu_custom_call.1} parent=11 // pred_region
          _
        $region24: #{tpu_custom_call.1} parent=11 // pred_fallthru
          _
      $region12: #{tpu_custom_call.1} parent=5 // pred_fallthru
        _
      %p218 = scmp.lt.s32.totalorder %s19, 3
      // Predicated region
      $region25: #{tpu_custom_call.1} parent=5 // pred_check
        %p219 = pneg %p218
      $region26: #{tpu_custom_call.1} parent=5 // pred_check_branch
        %221 = sbr.rel (%p219) target = $region28
      $region27: #{tpu_custom_call.1} parent=5 // pred_region
        // Predicated region
        $region29: #{tpu_custom_call.1} parent=27 // pred_check
          %p222 = pneg %p53
        $region30: #{tpu_custom_call.1} parent=27 // pred_check_branch
          %224 = sbr.rel (%p222) target = $region32
        $region31: #{tpu_custom_call.1} parent=27 // pred_region
          %s225 = sand.u32 %s43, 1
          %s226 = scalar_lea.sflag [#allocation4], %s225
          %s227 = sand.u32 %s43, 1
          %s228 = smul.addr %s227, 16
          %s229 = scalar_lea.vmem [#allocation3], %s228
          %s230 = smul.u32 4, %s26
          %232 = vsyncadd %s226, 0
          %s233 = smul.addr %s230, 3
          %s234 = sadd.s32 %s27, %s233
          %s235 = smul.addr %s234, 4
          %s236 = scalar_lea.hbm %s0, %s235
          %s237 = sshll.u32 %s236, 4
          %s238 = int_to_ptr.hbm [resolvable:$true] %s237
          %s239 = sshll.u32 %s229, 4
          %s240 = int_to_ptr.vmem [resolvable:$true] %s239
          %245 = dma.hbm_to_vmem [thread:$0]  %s238, 256, %s240, %s226, 192, 64, 4
        $region32: #{tpu_custom_call.1} parent=27 // pred_fallthru
          _
        // Predicated region
        $region33: #{tpu_custom_call.1} parent=27 // pred_check
          %p246 = pneg %p79
        $region34: #{tpu_custom_call.1} parent=27 // pred_check_branch
          %248 = sbr.rel (%p246) target = $region36
        $region35: #{tpu_custom_call.1} parent=27 // pred_region
          %s249 = sand.u32 %s19, 1
          %s250 = scalar_lea.sflag [#allocation7], %s249
          %s251 = sand.u32 %s69, 1
          %s252 = smul.addr %s251, 320
          %s253 = scalar_lea.vmem [#allocation6], %s252
          %s254 = smul.u32 16, %s27
          %256 = vsyncadd %s250, 0
          %s257 = smul.addr %s254, 5
          %s258 = smul.addr %s257, 4
          %s259 = scalar_lea.hbm %s1, %s258
          %s260 = sshll.u32 %s259, 4
          %s261 = int_to_ptr.hbm [resolvable:$true] %s260
          %s262 = sshll.u32 %s253, 4
          %s263 = int_to_ptr.vmem [resolvable:$true] %s262
          %268 = dma.hbm_to_vmem [thread:$0]  %s261, 5120, %s263, %s250, 320, 320, 20
        $region36: #{tpu_custom_call.1} parent=27 // pred_fallthru
          _
      $region28: #{tpu_custom_call.1} parent=5 // pred_fallthru
        _
      %p269 = scmp.le.s32.totalorder 1, %s19
      %p270 = scmp.lt.s32.totalorder %s19, 4
      %p271 = pnand %p269, %p270
      %p272 = pneg %p271
      // Predicated region
      $region37: #{tpu_custom_call.1} parent=5 // pred_check
        _
      $region38: #{tpu_custom_call.1} parent=5 // pred_check_branch
        %274 = sbr.rel (%p271) target = $region40
      $region39: #{tpu_custom_call.1} parent=5 // pred_region
        %s275 = ssub.s32 %s19, 1
        %s276 = sand.u32 %s46, 1
        %s277 = scalar_lea.sflag [#allocation4], %s276
        %s278 = sand.u32 %s46, 1
        %s279 = smul.addr %s278, 16
        %s280 = scalar_lea.vmem [#allocation3], %s279
        // Predicated region
        $region41: #{tpu_custom_call.1} parent=39 // pred_check
          %p281 = pneg %p59
        $region42: #{tpu_custom_call.1} parent=39 // pred_check_branch
          %283 = sbr.rel (%p281) target = $region44
        $region43: #{tpu_custom_call.1} parent=39 // pred_region
          %285 = dma.done %s277, 256
        $region44: #{tpu_custom_call.1} parent=39 // pred_fallthru
          _
        %s286 = sand.u32 %s24, 1
        %s287 = scalar_lea.sflag [#allocation7], %s286
        %s288 = sand.u32 %s72, 1
        %s289 = smul.addr %s288, 320
        %s290 = scalar_lea.vmem [#allocation6], %s289
        // Predicated region
        $region45: #{tpu_custom_call.1} parent=39 // pred_check
          %p291 = pneg %p85
        $region46: #{tpu_custom_call.1} parent=39 // pred_check_branch
          %293 = sbr.rel (%p291) target = $region48
        $region47: #{tpu_custom_call.1} parent=39 // pred_region
          %295 = dma.done %s287, 5120
        $region48: #{tpu_custom_call.1} parent=39 // pred_fallthru
          _
        // Predicated region
        $region49: #{tpu_custom_call.1} parent=39 // pred_check
          %p296 = pneg %p106
        $region50: #{tpu_custom_call.1} parent=39 // pred_check_branch
          %298 = sbr.rel (%p296) target = $region52
        $region51: #{tpu_custom_call.1} parent=39 // pred_region
          %300 = dma.done [#allocation7], 80
        $region52: #{tpu_custom_call.1} parent=39 // pred_fallthru
          _
        // Predicated region
        $region53: #{tpu_custom_call.1} parent=39 // pred_check
          %p301 = pneg %p127
        $region54: #{tpu_custom_call.1} parent=39 // pred_check_branch
          %303 = sbr.rel (%p301) target = $region56
        $region55: #{tpu_custom_call.1} parent=39 // pred_region
          %305 = dma.done [#allocation10], 5120
        $region56: #{tpu_custom_call.1} parent=39 // pred_fallthru
          _
        %s306 = sand.u32 %s46, 1
        %s307 = scalar_lea.sflag [#allocation4], %s306
        %s308 = sand.u32 %s46, 1
        %s309 = smul.addr %s308, 16
        %s310 = scalar_lea.vmem [#allocation3], %s309
        %p311 = pneg %p59
        %p312 = pneg %p56
        %s313 = sand.u32 %s24, 1
        %s314 = scalar_lea.sflag [#allocation7], %s313
        %s315 = sand.u32 %s72, 1
        %s316 = smul.addr %s315, 320
        %s317 = scalar_lea.vmem [#allocation6], %s316
        %p318 = pneg %p85
        %p319 = pneg %p82
        %p320 = pneg %p106
        %p321 = pneg %p103
        %p322 = pneg %p127
        %p323 = pneg %p124
        %p324 = pneg %p148
        %p325 = pneg %p145
        %p326 = pneg %p174
        %p327 = pneg %p171
        %s328 = smul.u32 4, %s28
        %s329 = smul.u32 16, %s29
        %s330 = smul.u32 4, %s28
        %p331 = scmp.eq.s32.totalorder %s29, 0
        // Predicated region
        $region57: #{tpu_custom_call.1} parent=39 // pred_check
          %p332 = pneg %p331
        $region58: #{tpu_custom_call.1} parent=39 // pred_check_branch
          %334 = sbr.rel (%p332) target = $region60
        $region59: #{tpu_custom_call.1} parent=39 // pred_region
          %335 = vst [vmem:[#allocation2] sm:$0xff] 0.0
          %336 = vst [vmem:[#allocation2 + $0x8] sm:$0xff] 0.0
          %337 = vst [vmem:[#allocation2 + $0x10] sm:$0xff] 0.0
          %338 = vst [vmem:[#allocation2 + $0x18] sm:$0xff] 0.0
          %339 = vst [vmem:[#allocation2 + $0x20] sm:$0xff] 0.0
          %340 = vst [vmem:[#allocation2 + $0x28] sm:$0xff] 0.0
          %341 = vst [vmem:[#allocation2 + $0x30] sm:$0xff] 0.0
          %342 = vst [vmem:[#allocation2 + $0x38] sm:$0xff] 0.0
          %343 = vst [vmem:[#allocation2 + $0x40] sm:$0xff] 0.0
          %344 = vst [vmem:[#allocation2 + $0x48] sm:$0xff] 0.0
          %345 = vst [vmem:[#allocation2 + $0x50] sm:$0xff] 0.0
          %346 = vst [vmem:[#allocation2 + $0x58] sm:$0xff] 0.0
          %347 = vst [vmem:[#allocation2 + $0x60] sm:$0xff] 0.0
          %348 = vst [vmem:[#allocation2 + $0x68] sm:$0xff] 0.0
          %349 = vst [vmem:[#allocation2 + $0x70] sm:$0xff] 0.0
          %350 = vst [vmem:[#allocation2 + $0x78] sm:$0xff] 0.0
          %351 = vst [vmem:[#allocation2 + $0x80] sm:$0xff] 0.0
          %352 = vst [vmem:[#allocation2 + $0x88] sm:$0xff] 0.0
          %353 = vst [vmem:[#allocation2 + $0x90] sm:$0xff] 0.0
          %354 = vst [vmem:[#allocation2 + $0x98] sm:$0xff] 0.0
        $region60: #{tpu_custom_call.1} parent=39 // pred_fallthru
          _
        %v355 = vld [vmem:[#allocation2] sm:$0xff]
        %v356 = vld [vmem:[#allocation2 + $0x8] sm:$0xff]
        %v357 = vld [vmem:[#allocation2 + $0x10] sm:$0xff]
        %v358 = vld [vmem:[#allocation2 + $0x18] sm:$0xff]
        %v359 = vld [vmem:[#allocation2 + $0x20] sm:$0xff]
        %v360 = vld [vmem:[#allocation2 + $0x28] sm:$0xff]
        %v361 = vld [vmem:[#allocation2 + $0x30] sm:$0xff]
        %v362 = vld [vmem:[#allocation2 + $0x38] sm:$0xff]
        %v363 = vld [vmem:[#allocation2 + $0x40] sm:$0xff]
        %v364 = vld [vmem:[#allocation2 + $0x48] sm:$0xff]
        %v365 = vld [vmem:[#allocation2 + $0x50] sm:$0xff]
        %v366 = vld [vmem:[#allocation2 + $0x58] sm:$0xff]
        %v367 = vld [vmem:[#allocation2 + $0x60] sm:$0xff]
        %v368 = vld [vmem:[#allocation2 + $0x68] sm:$0xff]
        %v369 = vld [vmem:[#allocation2 + $0x70] sm:$0xff]
        %v370 = vld [vmem:[#allocation2 + $0x78] sm:$0xff]
        %v371 = vld [vmem:[#allocation2 + $0x80] sm:$0xff]
        %v372 = vld [vmem:[#allocation2 + $0x88] sm:$0xff]
        %v373 = vld [vmem:[#allocation2 + $0x90] sm:$0xff]
        %v374 = vld [vmem:[#allocation2 + $0x98] sm:$0xff]
        %v375 = vld [vmem:[%s280] sm:$0xf]
        %v376 = vld [vmem:[%s280 + $0x4] sm:$0xf]
        %v377 = vld [vmem:[%s280 + $0x8] sm:$0xf]
        %v378 = vld [vmem:[%s280 + $0xc] sm:$0xf]
        %v379 = vld [vmem:[%s290] sm:$0xff]
        %v380 = vld [vmem:[%s290 + $0x8] sm:$0xff]
        %v381 = vld [vmem:[%s290 + $0x10] sm:$0xf]
        %v382 = vld [vmem:[%s290 + $0x14] sm:$0xff]
        %v383 = vld [vmem:[%s290 + $0x1c] sm:$0xff]
        %v384 = vld [vmem:[%s290 + $0x24] sm:$0xf]
        %v385 = vld [vmem:[%s290 + $0x28] sm:$0xff]
        %v386 = vld [vmem:[%s290 + $0x30] sm:$0xff]
        %v387 = vld [vmem:[%s290 + $0x38] sm:$0xf]
        %v388 = vld [vmem:[%s290 + $0x3c] sm:$0xff]
        %v389 = vld [vmem:[%s290 + $0x44] sm:$0xff]
        %v390 = vld [vmem:[%s290 + $0x4c] sm:$0xf]
        %v391 = vld [vmem:[%s290 + $0x50] sm:$0xff]
        %v392 = vld [vmem:[%s290 + $0x58] sm:$0xff]
        %v393 = vld [vmem:[%s290 + $0x60] sm:$0xf]
        %v394 = vld [vmem:[%s290 + $0x64] sm:$0xff]
        %v395 = vld [vmem:[%s290 + $0x6c] sm:$0xff]
        %v396 = vld [vmem:[%s290 + $0x74] sm:$0xf]
        %v397 = vld [vmem:[%s290 + $0x78] sm:$0xff]
        %v398 = vld [vmem:[%s290 + $0x80] sm:$0xff]
        %v399 = vld [vmem:[%s290 + $0x88] sm:$0xf]
        %v400 = vld [vmem:[%s290 + $0x8c] sm:$0xff]
        %v401 = vld [vmem:[%s290 + $0x94] sm:$0xff]
        %v402 = vld [vmem:[%s290 + $0x9c] sm:$0xf]
        %v403 = vld [vmem:[%s290 + $0xa0] sm:$0xff]
        %v404 = vld [vmem:[%s290 + $0xa8] sm:$0xff]
        %v405 = vld [vmem:[%s290 + $0xb0] sm:$0xf]
        %v406 = vld [vmem:[%s290 + $0xb4] sm:$0xff]
        %v407 = vld [vmem:[%s290 + $0xbc] sm:$0xff]
        %v408 = vld [vmem:[%s290 + $0xc4] sm:$0xf]
        %v409 = vld [vmem:[%s290 + $0xc8] sm:$0xff]
        %v410 = vld [vmem:[%s290 + $0xd0] sm:$0xff]
        %v411 = vld [vmem:[%s290 + $0xd8] sm:$0xf]
        %v412 = vld [vmem:[%s290 + $0xdc] sm:$0xff]
        %v413 = vld [vmem:[%s290 + $0xe4] sm:$0xff]
        %v414 = vld [vmem:[%s290 + $0xec] sm:$0xf]
        %v415 = vld [vmem:[%s290 + $0xf0] sm:$0xff]
        %v416 = vld [vmem:[%s290 + $0xf8] sm:$0xff]
        %v417 = vld [vmem:[%s290 + $0x100] sm:$0xf]
        %v418 = vld [vmem:[%s290 + $0x104] sm:$0xff]
        %v419 = vld [vmem:[%s290 + $0x10c] sm:$0xff]
        %v420 = vld [vmem:[%s290 + $0x114] sm:$0xf]
        %v421 = vld [vmem:[%s290 + $0x118] sm:$0xff]
        %v422 = vld [vmem:[%s290 + $0x120] sm:$0xff]
        %v423 = vld [vmem:[%s290 + $0x128] sm:$0xf]
        %v424 = vld [vmem:[%s290 + $0x12c] sm:$0xff]
        %v425 = vld [vmem:[%s290 + $0x134] sm:$0xff]
        %v426 = vld [vmem:[%s290 + $0x13c] sm:$0xf]
        %v431 = vunpack.c.l.b16 %v375
        %v432 = vunpack.c.l.b16 %v376
        %v433 = vunpack.c.l.b16 %v377
        %v434 = vunpack.c.l.b16 %v378
        %v435 = vpack.c.b16 %v432, %v431
        %v436 = vpack.c.b16 %v434, %v433
        %v487 = vunpack.c.l.b16 %v379
        %v488 = vunpack.c.h.b16 %v379
        %v489 = vunpack.c.l.b16 %v380
        %v490 = vunpack.c.h.b16 %v380
        %v491 = vunpack.c.l.b16 %v381
        %v492 = vunpack.c.l.b16 %v382
        %v493 = vunpack.c.h.b16 %v382
        %v494 = vunpack.c.l.b16 %v383
        %v495 = vunpack.c.h.b16 %v383
        %v496 = vunpack.c.l.b16 %v384
        %v497 = vunpack.c.l.b16 %v385
        %v498 = vunpack.c.h.b16 %v385
        %v499 = vunpack.c.l.b16 %v386
        %v500 = vunpack.c.h.b16 %v386
        %v501 = vunpack.c.l.b16 %v387
        %v502 = vunpack.c.l.b16 %v388
        %v503 = vunpack.c.h.b16 %v388
        %v504 = vunpack.c.l.b16 %v389
        %v505 = vunpack.c.h.b16 %v389
        %v506 = vunpack.c.l.b16 %v390
        %v507 = vunpack.c.l.b16 %v391
        %v508 = vunpack.c.h.b16 %v391
        %v509 = vunpack.c.l.b16 %v392
        %v510 = vunpack.c.h.b16 %v392
        %v511 = vunpack.c.l.b16 %v393
        %v512 = vunpack.c.l.b16 %v394
        %v513 = vunpack.c.h.b16 %v394
        %v514 = vunpack.c.l.b16 %v395
        %v515 = vunpack.c.h.b16 %v395
        %v516 = vunpack.c.l.b16 %v396
        %v517 = vunpack.c.l.b16 %v397
        %v518 = vunpack.c.h.b16 %v397
        %v519 = vunpack.c.l.b16 %v398
        %v520 = vunpack.c.h.b16 %v398
        %v521 = vunpack.c.l.b16 %v399
        %v522 = vunpack.c.l.b16 %v400
        %v523 = vunpack.c.h.b16 %v400
        %v524 = vunpack.c.l.b16 %v401
        %v525 = vunpack.c.h.b16 %v401
        %v526 = vunpack.c.l.b16 %v402
        %v527 = vunpack.c.l.b16 %v403
        %v528 = vunpack.c.h.b16 %v403
        %v529 = vunpack.c.l.b16 %v404
        %v530 = vunpack.c.h.b16 %v404
        %v531 = vunpack.c.l.b16 %v405
        %v532 = vunpack.c.l.b16 %v406
        %v533 = vunpack.c.h.b16 %v406
        %v534 = vunpack.c.l.b16 %v407
        %v535 = vunpack.c.h.b16 %v407
        %v536 = vunpack.c.l.b16 %v408
        %v537 = vunpack.c.l.b16 %v409
        %v538 = vunpack.c.h.b16 %v409
        %v539 = vunpack.c.l.b16 %v410
        %v540 = vunpack.c.h.b16 %v410
        %v541 = vunpack.c.l.b16 %v411
        %v542 = vunpack.c.l.b16 %v412
        %v543 = vunpack.c.h.b16 %v412
        %v544 = vunpack.c.l.b16 %v413
        %v545 = vunpack.c.h.b16 %v413
        %v546 = vunpack.c.l.b16 %v414
        %v547 = vunpack.c.l.b16 %v415
        %v548 = vunpack.c.h.b16 %v415
        %v549 = vunpack.c.l.b16 %v416
        %v550 = vunpack.c.h.b16 %v416
        %v551 = vunpack.c.l.b16 %v417
        %v552 = vunpack.c.l.b16 %v418
        %v553 = vunpack.c.h.b16 %v418
        %v554 = vunpack.c.l.b16 %v419
        %v555 = vunpack.c.h.b16 %v419
        %v556 = vunpack.c.l.b16 %v420
        %v557 = vunpack.c.l.b16 %v421
        %v558 = vunpack.c.h.b16 %v421
        %v559 = vunpack.c.l.b16 %v422
        %v560 = vunpack.c.h.b16 %v422
        %v561 = vunpack.c.l.b16 %v423
        %v562 = vunpack.c.l.b16 %v424
        %v563 = vunpack.c.h.b16 %v424
        %v564 = vunpack.c.l.b16 %v425
        %v565 = vunpack.c.h.b16 %v425
        %v566 = vunpack.c.l.b16 %v426
        %v567 = vpack.c.b16 %v492, %v487
        %v568 = vpack.c.b16 %v493, %v488
        %v569 = vpack.c.b16 %v494, %v489
        %v570 = vpack.c.b16 %v495, %v490
        %v571 = vpack.c.b16 %v496, %v491
        %v572 = vpack.c.b16 %v502, %v497
        %v573 = vpack.c.b16 %v503, %v498
        %v574 = vpack.c.b16 %v504, %v499
        %v575 = vpack.c.b16 %v505, %v500
        %v576 = vpack.c.b16 %v506, %v501
        %v577 = vpack.c.b16 %v512, %v507
        %v578 = vpack.c.b16 %v513, %v508
        %v579 = vpack.c.b16 %v514, %v509
        %v580 = vpack.c.b16 %v515, %v510
        %v581 = vpack.c.b16 %v516, %v511
        %v582 = vpack.c.b16 %v522, %v517
        %v583 = vpack.c.b16 %v523, %v518
        %v584 = vpack.c.b16 %v524, %v519
        %v585 = vpack.c.b16 %v525, %v520
        %v586 = vpack.c.b16 %v526, %v521
        %v587 = vpack.c.b16 %v532, %v527
        %v588 = vpack.c.b16 %v533, %v528
        %v589 = vpack.c.b16 %v534, %v529
        %v590 = vpack.c.b16 %v535, %v530
        %v591 = vpack.c.b16 %v536, %v531
        %v592 = vpack.c.b16 %v542, %v537
        %v593 = vpack.c.b16 %v543, %v538
        %v594 = vpack.c.b16 %v544, %v539
        %v595 = vpack.c.b16 %v545, %v540
        %v596 = vpack.c.b16 %v546, %v541
        %v597 = vpack.c.b16 %v552, %v547
        %v598 = vpack.c.b16 %v553, %v548
        %v599 = vpack.c.b16 %v554, %v549
        %v600 = vpack.c.b16 %v555, %v550
        %v601 = vpack.c.b16 %v556, %v551
        %v602 = vpack.c.b16 %v562, %v557
        %v603 = vpack.c.b16 %v563, %v558
        %v604 = vpack.c.b16 %v564, %v559
        %v605 = vpack.c.b16 %v565, %v560
        %v606 = vpack.c.b16 %v566, %v561
        %647 = vmatpush.bf16.msra.mxu0 %v602
        %648 = vmatpush.bf16.msra.mxu0 %v597
        %649 = vmatpush.bf16.msra.mxu0 %v592
        %650 = vmatpush.bf16.msra.mxu0 %v587
        %651 = vmatpush.bf16.msra.mxu0 %v582
        %652 = vmatpush.bf16.msra.mxu0 %v577
        %653 = vmatpush.bf16.msra.mxu0 %v572
        %654 = vmatpush.bf16.msra.mxu0 %v567
        %655 = vmatmul.bf16.gmra.mxu0 %v435
        %v656 = vpop.f32.mrf.mxu0
        %v657 = vadd.f32 0.0, %v656
        %v658 = vpop.f32.mrf.mxu0
        %v659 = vadd.f32 0.0, %v658
        %660 = vmatmul.bf16.gmra.mxu0 %v436
        %v661 = vpop.f32.mrf.mxu0
        %v662 = vadd.f32 0.0, %v661
        %v663 = vpop.f32.mrf.mxu0
        %v664 = vadd.f32 0.0, %v663
        %665 = vdwg.mxu0
        %666 = vmatpush.bf16.msra.mxu0 %v603
        %667 = vmatpush.bf16.msra.mxu0 %v598
        %668 = vmatpush.bf16.msra.mxu0 %v593
        %669 = vmatpush.bf16.msra.mxu0 %v588
        %670 = vmatpush.bf16.msra.mxu0 %v583
        %671 = vmatpush.bf16.msra.mxu0 %v578
        %672 = vmatpush.bf16.msra.mxu0 %v573
        %673 = vmatpush.bf16.msra.mxu0 %v568
        %674 = vmatmul.bf16.gmra.mxu0 %v435
        %v675 = vpop.f32.mrf.mxu0
        %v676 = vadd.f32 0.0, %v675
        %v677 = vpop.f32.mrf.mxu0
        %v678 = vadd.f32 0.0, %v677
        %679 = vmatmul.bf16.gmra.mxu0 %v436
        %v680 = vpop.f32.mrf.mxu0
        %v681 = vadd.f32 0.0, %v680
        %v682 = vpop.f32.mrf.mxu0
        %v683 = vadd.f32 0.0, %v682
        %684 = vdwg.mxu0
        %685 = vmatpush.bf16.msra.mxu0 %v604
        %686 = vmatpush.bf16.msra.mxu0 %v599
        %687 = vmatpush.bf16.msra.mxu0 %v594
        %688 = vmatpush.bf16.msra.mxu0 %v589
        %689 = vmatpush.bf16.msra.mxu0 %v584
        %690 = vmatpush.bf16.msra.mxu0 %v579
        %691 = vmatpush.bf16.msra.mxu0 %v574
        %692 = vmatpush.bf16.msra.mxu0 %v569
        %693 = vmatmul.bf16.gmra.mxu0 %v435
        %v694 = vpop.f32.mrf.mxu0
        %v695 = vadd.f32 0.0, %v694
        %v696 = vpop.f32.mrf.mxu0
        %v697 = vadd.f32 0.0, %v696
        %698 = vmatmul.bf16.gmra.mxu0 %v436
        %v699 = vpop.f32.mrf.mxu0
        %v700 = vadd.f32 0.0, %v699
        %v701 = vpop.f32.mrf.mxu0
        %v702 = vadd.f32 0.0, %v701
        %703 = vdwg.mxu0
        %704 = vmatpush.bf16.msra.mxu0 %v605
        %705 = vmatpush.bf16.msra.mxu0 %v600
        %706 = vmatpush.bf16.msra.mxu0 %v595
        %707 = vmatpush.bf16.msra.mxu0 %v590
        %708 = vmatpush.bf16.msra.mxu0 %v585
        %709 = vmatpush.bf16.msra.mxu0 %v580
        %710 = vmatpush.bf16.msra.mxu0 %v575
        %711 = vmatpush.bf16.msra.mxu0 %v570
        %712 = vmatmul.bf16.gmra.mxu0 %v435
        %v713 = vpop.f32.mrf.mxu0
        %v714 = vadd.f32 0.0, %v713
        %v715 = vpop.f32.mrf.mxu0
        %v716 = vadd.f32 0.0, %v715
        %717 = vmatmul.bf16.gmra.mxu0 %v436
        %v718 = vpop.f32.mrf.mxu0
        %v719 = vadd.f32 0.0, %v718
        %v720 = vpop.f32.mrf.mxu0
        %v721 = vadd.f32 0.0, %v720
        %722 = vdwg.mxu0
        %723 = vmatpush.bf16.msra.mxu0 %v606
        %724 = vmatpush.bf16.msra.mxu0 %v601
        %725 = vmatpush.bf16.msra.mxu0 %v596
        %726 = vmatpush.bf16.msra.mxu0 %v591
        %727 = vmatpush.bf16.msra.mxu0 %v586
        %728 = vmatpush.bf16.msra.mxu0 %v581
        %729 = vmatpush.bf16.msra.mxu0 %v576
        %730 = vmatpush.bf16.msra.mxu0 %v571
        %731 = vmatmul.bf16.gmra.mxu0 %v435
        %v732 = vpop.f32.mrf.mxu0
        %v733 = vadd.f32 0.0, %v732
        %v734 = vpop.f32.mrf.mxu0
        %v735 = vadd.f32 0.0, %v734
        %736 = vmatmul.bf16.gmra.mxu0 %v436
        %v737 = vpop.f32.mrf.mxu0
        %v738 = vadd.f32 0.0, %v737
        %v739 = vpop.f32.mrf.mxu0
        %v740 = vadd.f32 0.0, %v739
        %741 = vdwg.mxu0
        %v742 = vadd.f32 %v355, %v657
        %v743 = vadd.f32 %v356, %v676
        %v744 = vadd.f32 %v357, %v695
        %v745 = vadd.f32 %v358, %v714
        %v746 = vadd.f32 %v359, %v733
        %v747 = vadd.f32 %v360, %v659
        %v748 = vadd.f32 %v361, %v678
        %v749 = vadd.f32 %v362, %v697
        %v750 = vadd.f32 %v363, %v716
        %v751 = vadd.f32 %v364, %v735
        %v752 = vadd.f32 %v365, %v662
        %v753 = vadd.f32 %v366, %v681
        %v754 = vadd.f32 %v367, %v700
        %v755 = vadd.f32 %v368, %v719
        %v756 = vadd.f32 %v369, %v738
        %v757 = vadd.f32 %v370, %v664
        %v758 = vadd.f32 %v371, %v683
        %v759 = vadd.f32 %v372, %v702
        %v760 = vadd.f32 %v373, %v721
        %v761 = vadd.f32 %v374, %v740
        %762 = vst [vmem:[#allocation2] sm:$0xff] %v742
        %763 = vst [vmem:[#allocation2 + $0x8] sm:$0xff] %v743
        %764 = vst [vmem:[#allocation2 + $0x10] sm:$0xff] %v744
        %765 = vst [vmem:[#allocation2 + $0x18] sm:$0xff] %v745
        %766 = vst [vmem:[#allocation2 + $0x20] sm:$0xff] %v746
        %767 = vst [vmem:[#allocation2 + $0x28] sm:$0xff] %v747
        %768 = vst [vmem:[#allocation2 + $0x30] sm:$0xff] %v748
        %769 = vst [vmem:[#allocation2 + $0x38] sm:$0xff] %v749
        %770 = vst [vmem:[#allocation2 + $0x40] sm:$0xff] %v750
        %771 = vst [vmem:[#allocation2 + $0x48] sm:$0xff] %v751
        %772 = vst [vmem:[#allocation2 + $0x50] sm:$0xff] %v752
        %773 = vst [vmem:[#allocation2 + $0x58] sm:$0xff] %v753
        %774 = vst [vmem:[#allocation2 + $0x60] sm:$0xff] %v754
        %775 = vst [vmem:[#allocation2 + $0x68] sm:$0xff] %v755
        %776 = vst [vmem:[#allocation2 + $0x70] sm:$0xff] %v756
        %777 = vst [vmem:[#allocation2 + $0x78] sm:$0xff] %v757
        %778 = vst [vmem:[#allocation2 + $0x80] sm:$0xff] %v758
        %779 = vst [vmem:[#allocation2 + $0x88] sm:$0xff] %v759
        %780 = vst [vmem:[#allocation2 + $0x90] sm:$0xff] %v760
        %781 = vst [vmem:[#allocation2 + $0x98] sm:$0xff] %v761
        %p782 = scmp.eq.s32.totalorder %s29, 2
        // Predicated region
        $region61: #{tpu_custom_call.1} parent=39 // pred_check
          %p783 = pneg %p782
        $region62: #{tpu_custom_call.1} parent=39 // pred_check_branch
          %785 = sbr.rel (%p783) target = $region64
        $region63: #{tpu_custom_call.1} parent=39 // pred_region
          %v786 = vld [vmem:[#allocation2] sm:$0xff]
          %v787 = vld [vmem:[#allocation2 + $0x8] sm:$0xff]
          %v788 = vld [vmem:[#allocation2 + $0x10] sm:$0xff]
          %v789 = vld [vmem:[#allocation2 + $0x18] sm:$0xff]
          %v790 = vld [vmem:[#allocation2 + $0x20] sm:$0xff]
          %v791 = vld [vmem:[#allocation2 + $0x28] sm:$0xff]
          %v792 = vld [vmem:[#allocation2 + $0x30] sm:$0xff]
          %v793 = vld [vmem:[#allocation2 + $0x38] sm:$0xff]
          %v794 = vld [vmem:[#allocation2 + $0x40] sm:$0xff]
          %v795 = vld [vmem:[#allocation2 + $0x48] sm:$0xff]
          %v796 = vld [vmem:[#allocation2 + $0x50] sm:$0xff]
          %v797 = vld [vmem:[#allocation2 + $0x58] sm:$0xff]
          %v798 = vld [vmem:[#allocation2 + $0x60] sm:$0xff]
          %v799 = vld [vmem:[#allocation2 + $0x68] sm:$0xff]
          %v800 = vld [vmem:[#allocation2 + $0x70] sm:$0xff]
          %v801 = vld [vmem:[#allocation2 + $0x78] sm:$0xff]
          %v802 = vld [vmem:[#allocation2 + $0x80] sm:$0xff]
          %v803 = vld [vmem:[#allocation2 + $0x88] sm:$0xff]
          %v804 = vld [vmem:[#allocation2 + $0x90] sm:$0xff]
          %v805 = vld [vmem:[#allocation2 + $0x98] sm:$0xff]
          %v806 = vld [vmem:[#allocation8] sm:$0x1f]
          %v808 = vperm.slane %v806, 0
          %v809 = vperm.slane %v806, 1
          %v810 = vperm.slane %v806, 2
          %v811 = vperm.slane %v806, 3
          %v812 = vperm.slane %v806, 4
          %v818 = vadd.f32 %v786, %v808
          %v819 = vadd.f32 %v787, %v809
          %v820 = vadd.f32 %v788, %v810
          %v821 = vadd.f32 %v789, %v811
          %v822 = vadd.f32 %v790, %v812
          %v823 = vadd.f32 %v791, %v808
          %v824 = vadd.f32 %v792, %v809
          %v825 = vadd.f32 %v793, %v810
          %v826 = vadd.f32 %v794, %v811
          %v827 = vadd.f32 %v795, %v812
          %v828 = vadd.f32 %v796, %v808
          %v829 = vadd.f32 %v797, %v809
          %v830 = vadd.f32 %v798, %v810
          %v831 = vadd.f32 %v799, %v811
          %v832 = vadd.f32 %v800, %v812
          %v833 = vadd.f32 %v801, %v808
          %v834 = vadd.f32 %v802, %v809
          %v835 = vadd.f32 %v803, %v810
          %v836 = vadd.f32 %v804, %v811
          %v837 = vadd.f32 %v805, %v812
          %v838 = vmax.f32 %v818, 0.0
          %v839 = vmax.f32 %v819, 0.0
          %v840 = vmax.f32 %v820, 0.0
          %v841 = vmax.f32 %v821, 0.0
          %v842 = vmax.f32 %v822, 0.0
          %v843 = vmax.f32 %v823, 0.0
          %v844 = vmax.f32 %v824, 0.0
          %v845 = vmax.f32 %v825, 0.0
          %v846 = vmax.f32 %v826, 0.0
          %v847 = vmax.f32 %v827, 0.0
          %v848 = vmax.f32 %v828, 0.0
          %v849 = vmax.f32 %v829, 0.0
          %v850 = vmax.f32 %v830, 0.0
          %v851 = vmax.f32 %v831, 0.0
          %v852 = vmax.f32 %v832, 0.0
          %v853 = vmax.f32 %v833, 0.0
          %v854 = vmax.f32 %v834, 0.0
          %v855 = vmax.f32 %v835, 0.0
          %v856 = vmax.f32 %v836, 0.0
          %v857 = vmax.f32 %v837, 0.0
          %v858 = vpack.c.bf16 %v843, %v838
          %v859 = vpack.c.bf16 %v844, %v839
          %v860 = vpack.c.bf16 %v845, %v840
          %v861 = vpack.c.bf16 %v846, %v841
          %v862 = vpack.c.bf16 %v847, %v842
          %v863 = vpack.c.bf16 %v853, %v848
          %v864 = vpack.c.bf16 %v854, %v849
          %v865 = vpack.c.bf16 %v855, %v850
          %v866 = vpack.c.bf16 %v856, %v851
          %v867 = vpack.c.bf16 %v857, %v852
          %v868 = vld [vmem:[#allocation9] sm:$0xf]
          %v869 = vld [vmem:[#allocation9 + $0x4] sm:$0xf]
          %v870 = vld [vmem:[#allocation9 + $0x8] sm:$0xf]
          %v871 = vld [vmem:[#allocation9 + $0xc] sm:$0xf]
          %v872 = vld [vmem:[#allocation9 + $0x10] sm:$0xf]
          %v873 = vld [vmem:[#allocation9 + $0x14] sm:$0xf]
          %v874 = vld [vmem:[#allocation9 + $0x18] sm:$0xf]
          %v875 = vld [vmem:[#allocation9 + $0x1c] sm:$0xf]
          %v876 = vld [vmem:[#allocation9 + $0x20] sm:$0xf]
          %v877 = vld [vmem:[#allocation9 + $0x24] sm:$0xf]
          %v878 = vld [vmem:[#allocation9 + $0x28] sm:$0xf]
          %v879 = vld [vmem:[#allocation9 + $0x2c] sm:$0xf]
          %v880 = vld [vmem:[#allocation9 + $0x30] sm:$0xf]
          %v881 = vld [vmem:[#allocation9 + $0x34] sm:$0xf]
          %v882 = vld [vmem:[#allocation9 + $0x38] sm:$0xf]
          %v883 = vld [vmem:[#allocation9 + $0x3c] sm:$0xf]
          %v884 = vld [vmem:[#allocation9 + $0x40] sm:$0xf]
          %v885 = vld [vmem:[#allocation9 + $0x44] sm:$0xf]
          %v886 = vld [vmem:[#allocation9 + $0x48] sm:$0xf]
          %v887 = vld [vmem:[#allocation9 + $0x4c] sm:$0xf]
          %v888 = vld [vmem:[#allocation9 + $0x50] sm:$0xf]
          %v889 = vld [vmem:[#allocation9 + $0x54] sm:$0xf]
          %v890 = vld [vmem:[#allocation9 + $0x58] sm:$0xf]
          %v891 = vld [vmem:[#allocation9 + $0x5c] sm:$0xf]
          %v892 = vld [vmem:[#allocation9 + $0x60] sm:$0xf]
          %v893 = vld [vmem:[#allocation9 + $0x64] sm:$0xf]
          %v894 = vld [vmem:[#allocation9 + $0x68] sm:$0xf]
          %v895 = vld [vmem:[#allocation9 + $0x6c] sm:$0xf]
          %v896 = vld [vmem:[#allocation9 + $0x70] sm:$0xf]
          %v897 = vld [vmem:[#allocation9 + $0x74] sm:$0xf]
          %v898 = vld [vmem:[#allocation9 + $0x78] sm:$0xf]
          %v899 = vld [vmem:[#allocation9 + $0x7c] sm:$0xf]
          %v900 = vld [vmem:[#allocation9 + $0x80] sm:$0xf]
          %v901 = vld [vmem:[#allocation9 + $0x84] sm:$0xf]
          %v902 = vld [vmem:[#allocation9 + $0x88] sm:$0xf]
          %v903 = vld [vmem:[#allocation9 + $0x8c] sm:$0xf]
          %v904 = vld [vmem:[#allocation9 + $0x90] sm:$0xf]
          %v905 = vld [vmem:[#allocation9 + $0x94] sm:$0xf]
          %v906 = vld [vmem:[#allocation9 + $0x98] sm:$0xf]
          %v907 = vld [vmem:[#allocation9 + $0x9c] sm:$0xf]
          %v908 = vld [vmem:[#allocation9 + $0xa0] sm:$0xf]
          %v909 = vld [vmem:[#allocation9 + $0xa4] sm:$0xf]
          %v910 = vld [vmem:[#allocation9 + $0xa8] sm:$0xf]
          %v911 = vld [vmem:[#allocation9 + $0xac] sm:$0xf]
          %v912 = vld [vmem:[#allocation9 + $0xb0] sm:$0xf]
          %v913 = vld [vmem:[#allocation9 + $0xb4] sm:$0xf]
          %v914 = vld [vmem:[#allocation9 + $0xb8] sm:$0xf]
          %v915 = vld [vmem:[#allocation9 + $0xbc] sm:$0xf]
          %v916 = vld [vmem:[#allocation9 + $0xc0] sm:$0xf]
          %v917 = vld [vmem:[#allocation9 + $0xc4] sm:$0xf]
          %v918 = vld [vmem:[#allocation9 + $0xc8] sm:$0xf]
          %v919 = vld [vmem:[#allocation9 + $0xcc] sm:$0xf]
          %v920 = vld [vmem:[#allocation9 + $0xd0] sm:$0xf]
          %v921 = vld [vmem:[#allocation9 + $0xd4] sm:$0xf]
          %v922 = vld [vmem:[#allocation9 + $0xd8] sm:$0xf]
          %v923 = vld [vmem:[#allocation9 + $0xdc] sm:$0xf]
          %v924 = vld [vmem:[#allocation9 + $0xe0] sm:$0xf]
          %v925 = vld [vmem:[#allocation9 + $0xe4] sm:$0xf]
          %v926 = vld [vmem:[#allocation9 + $0xe8] sm:$0xf]
          %v927 = vld [vmem:[#allocation9 + $0xec] sm:$0xf]
          %v928 = vld [vmem:[#allocation9 + $0xf0] sm:$0xf]
          %v929 = vld [vmem:[#allocation9 + $0xf4] sm:$0xf]
          %v930 = vld [vmem:[#allocation9 + $0xf8] sm:$0xf]
          %v931 = vld [vmem:[#allocation9 + $0xfc] sm:$0xf]
          %v932 = vld [vmem:[#allocation9 + $0x100] sm:$0xf]
          %v933 = vld [vmem:[#allocation9 + $0x104] sm:$0xf]
          %v934 = vld [vmem:[#allocation9 + $0x108] sm:$0xf]
          %v935 = vld [vmem:[#allocation9 + $0x10c] sm:$0xf]
          %v936 = vld [vmem:[#allocation9 + $0x110] sm:$0xf]
          %v937 = vld [vmem:[#allocation9 + $0x114] sm:$0xf]
          %v938 = vld [vmem:[#allocation9 + $0x118] sm:$0xf]
          %v939 = vld [vmem:[#allocation9 + $0x11c] sm:$0xf]
          %v940 = vld [vmem:[#allocation9 + $0x120] sm:$0xf]
          %v941 = vld [vmem:[#allocation9 + $0x124] sm:$0xf]
          %v942 = vld [vmem:[#allocation9 + $0x128] sm:$0xf]
          %v943 = vld [vmem:[#allocation9 + $0x12c] sm:$0xf]
          %v944 = vld [vmem:[#allocation9 + $0x130] sm:$0xf]
          %v945 = vld [vmem:[#allocation9 + $0x134] sm:$0xf]
          %v946 = vld [vmem:[#allocation9 + $0x138] sm:$0xf]
          %v947 = vld [vmem:[#allocation9 + $0x13c] sm:$0xf]
          %v948 = vld [vmem:[%s4] sm:$0x1]
          %v950 = vperm.slane %v948, 0
          %v1032 = vunpack.c.l.b16 %v868
          %v1033 = vunpack.c.l.b16 %v869
          %v1034 = vunpack.c.l.b16 %v870
          %v1035 = vunpack.c.l.b16 %v871
          %v1036 = vunpack.c.l.b16 %v872
          %v1037 = vunpack.c.l.b16 %v873
          %v1038 = vunpack.c.l.b16 %v874
          %v1039 = vunpack.c.l.b16 %v875
          %v1040 = vunpack.c.l.b16 %v876
          %v1041 = vunpack.c.l.b16 %v877
          %v1042 = vunpack.c.l.b16 %v878
          %v1043 = vunpack.c.l.b16 %v879
          %v1044 = vunpack.c.l.b16 %v880
          %v1045 = vunpack.c.l.b16 %v881
          %v1046 = vunpack.c.l.b16 %v882
          %v1047 = vunpack.c.l.b16 %v883
          %v1048 = vunpack.c.l.b16 %v884
          %v1049 = vunpack.c.l.b16 %v885
          %v1050 = vunpack.c.l.b16 %v886
          %v1051 = vunpack.c.l.b16 %v887
          %v1052 = vunpack.c.l.b16 %v888
          %v1053 = vunpack.c.l.b16 %v889
          %v1054 = vunpack.c.l.b16 %v890
          %v1055 = vunpack.c.l.b16 %v891
          %v1056 = vunpack.c.l.b16 %v892
          %v1057 = vunpack.c.l.b16 %v893
          %v1058 = vunpack.c.l.b16 %v894
          %v1059 = vunpack.c.l.b16 %v895
          %v1060 = vunpack.c.l.b16 %v896
          %v1061 = vunpack.c.l.b16 %v897
          %v1062 = vunpack.c.l.b16 %v898
          %v1063 = vunpack.c.l.b16 %v899
          %v1064 = vunpack.c.l.b16 %v900
          %v1065 = vunpack.c.l.b16 %v901
          %v1066 = vunpack.c.l.b16 %v902
          %v1067 = vunpack.c.l.b16 %v903
          %v1068 = vunpack.c.l.b16 %v904
          %v1069 = vunpack.c.l.b16 %v905
          %v1070 = vunpack.c.l.b16 %v906
          %v1071 = vunpack.c.l.b16 %v907
          %v1072 = vunpack.c.l.b16 %v908
          %v1073 = vunpack.c.l.b16 %v909
          %v1074 = vunpack.c.l.b16 %v910
          %v1075 = vunpack.c.l.b16 %v911
          %v1076 = vunpack.c.l.b16 %v912
          %v1077 = vunpack.c.l.b16 %v913
          %v1078 = vunpack.c.l.b16 %v914
          %v1079 = vunpack.c.l.b16 %v915
          %v1080 = vunpack.c.l.b16 %v916
          %v1081 = vunpack.c.l.b16 %v917
          %v1082 = vunpack.c.l.b16 %v918
          %v1083 = vunpack.c.l.b16 %v919
          %v1084 = vunpack.c.l.b16 %v920
          %v1085 = vunpack.c.l.b16 %v921
          %v1086 = vunpack.c.l.b16 %v922
          %v1087 = vunpack.c.l.b16 %v923
          %v1088 = vunpack.c.l.b16 %v924
          %v1089 = vunpack.c.l.b16 %v925
          %v1090 = vunpack.c.l.b16 %v926
          %v1091 = vunpack.c.l.b16 %v927
          %v1092 = vunpack.c.l.b16 %v928
          %v1093 = vunpack.c.l.b16 %v929
          %v1094 = vunpack.c.l.b16 %v930
          %v1095 = vunpack.c.l.b16 %v931
          %v1096 = vunpack.c.l.b16 %v932
          %v1097 = vunpack.c.l.b16 %v933
          %v1098 = vunpack.c.l.b16 %v934
          %v1099 = vunpack.c.l.b16 %v935
          %v1100 = vunpack.c.l.b16 %v936
          %v1101 = vunpack.c.l.b16 %v937
          %v1102 = vunpack.c.l.b16 %v938
          %v1103 = vunpack.c.l.b16 %v939
          %v1104 = vunpack.c.l.b16 %v940
          %v1105 = vunpack.c.l.b16 %v941
          %v1106 = vunpack.c.l.b16 %v942
          %v1107 = vunpack.c.l.b16 %v943
          %v1108 = vunpack.c.l.b16 %v944
          %v1109 = vunpack.c.l.b16 %v945
          %v1110 = vunpack.c.l.b16 %v946
          %v1111 = vunpack.c.l.b16 %v947
          %v1112 = vpack.c.b16 %v1033, %v1032
          %v1113 = vpack.c.b16 %v1035, %v1034
          %v1114 = vpack.c.b16 %v1037, %v1036
          %v1115 = vpack.c.b16 %v1039, %v1038
          %v1116 = vpack.c.b16 %v1041, %v1040
          %v1117 = vpack.c.b16 %v1043, %v1042
          %v1118 = vpack.c.b16 %v1045, %v1044
          %v1119 = vpack.c.b16 %v1047, %v1046
          %v1120 = vpack.c.b16 %v1049, %v1048
          %v1121 = vpack.c.b16 %v1051, %v1050
          %v1122 = vpack.c.b16 %v1053, %v1052
          %v1123 = vpack.c.b16 %v1055, %v1054
          %v1124 = vpack.c.b16 %v1057, %v1056
          %v1125 = vpack.c.b16 %v1059, %v1058
          %v1126 = vpack.c.b16 %v1061, %v1060
          %v1127 = vpack.c.b16 %v1063, %v1062
          %v1128 = vpack.c.b16 %v1065, %v1064
          %v1129 = vpack.c.b16 %v1067, %v1066
          %v1130 = vpack.c.b16 %v1069, %v1068
          %v1131 = vpack.c.b16 %v1071, %v1070
          %v1132 = vpack.c.b16 %v1073, %v1072
          %v1133 = vpack.c.b16 %v1075, %v1074
          %v1134 = vpack.c.b16 %v1077, %v1076
          %v1135 = vpack.c.b16 %v1079, %v1078
          %v1136 = vpack.c.b16 %v1081, %v1080
          %v1137 = vpack.c.b16 %v1083, %v1082
          %v1138 = vpack.c.b16 %v1085, %v1084
          %v1139 = vpack.c.b16 %v1087, %v1086
          %v1140 = vpack.c.b16 %v1089, %v1088
          %v1141 = vpack.c.b16 %v1091, %v1090
          %v1142 = vpack.c.b16 %v1093, %v1092
          %v1143 = vpack.c.b16 %v1095, %v1094
          %v1144 = vpack.c.b16 %v1097, %v1096
          %v1145 = vpack.c.b16 %v1099, %v1098
          %v1146 = vpack.c.b16 %v1101, %v1100
          %v1147 = vpack.c.b16 %v1103, %v1102
          %v1148 = vpack.c.b16 %v1105, %v1104
          %v1149 = vpack.c.b16 %v1107, %v1106
          %v1150 = vpack.c.b16 %v1109, %v1108
          %v1151 = vpack.c.b16 %v1111, %v1110
          %1192 = vmatpush.bf16.msra.mxu0 %v1119
          %1193 = vmatpush.bf16.msra.mxu0 %v1118
          %1194 = vmatpush.bf16.msra.mxu0 %v1117
          %1195 = vmatpush.bf16.msra.mxu0 %v1116
          %1196 = vmatpush.bf16.msra.mxu0 %v1115
          %1197 = vmatpush.bf16.msra.mxu0 %v1114
          %1198 = vmatpush.bf16.msra.mxu0 %v1113
          %1199 = vmatpush.bf16.msra.mxu0 %v1112
          %1200 = vmatmul.bf16.gmra.mxu0 %v858
          %v1201 = vpop.f32.mrf.mxu0
          %v1202 = vadd.f32 %v950, %v1201
          %v1203 = vpop.f32.mrf.mxu0
          %v1204 = vadd.f32 %v950, %v1203
          %1205 = vmatmul.bf16.gmra.mxu0 %v863
          %v1206 = vpop.f32.mrf.mxu0
          %v1207 = vadd.f32 %v950, %v1206
          %v1208 = vpop.f32.mrf.mxu0
          %v1209 = vadd.f32 %v950, %v1208
          %1210 = vdwg.mxu0
          %1211 = vmatpush.bf16.msra.mxu0 %v1127
          %1212 = vmatpush.bf16.msra.mxu0 %v1126
          %1213 = vmatpush.bf16.msra.mxu0 %v1125
          %1214 = vmatpush.bf16.msra.mxu0 %v1124
          %1215 = vmatpush.bf16.msra.mxu0 %v1123
          %1216 = vmatpush.bf16.msra.mxu0 %v1122
          %1217 = vmatpush.bf16.msra.mxu0 %v1121
          %1218 = vmatpush.bf16.msra.mxu0 %v1120
          %1219 = vmatmul.bf16.gmra.mxu0 %v859
          %v1220 = vpop.f32.mrf.mxu0
          %v1221 = vadd.f32 %v1202, %v1220
          %v1222 = vpop.f32.mrf.mxu0
          %v1223 = vadd.f32 %v1204, %v1222
          %1224 = vmatmul.bf16.gmra.mxu0 %v864
          %v1225 = vpop.f32.mrf.mxu0
          %v1226 = vadd.f32 %v1207, %v1225
          %v1227 = vpop.f32.mrf.mxu0
          %v1228 = vadd.f32 %v1209, %v1227
          %1229 = vdwg.mxu0
          %1230 = vmatpush.bf16.msra.mxu0 %v1135
          %1231 = vmatpush.bf16.msra.mxu0 %v1134
          %1232 = vmatpush.bf16.msra.mxu0 %v1133
          %1233 = vmatpush.bf16.msra.mxu0 %v1132
          %1234 = vmatpush.bf16.msra.mxu0 %v1131
          %1235 = vmatpush.bf16.msra.mxu0 %v1130
          %1236 = vmatpush.bf16.msra.mxu0 %v1129
          %1237 = vmatpush.bf16.msra.mxu0 %v1128
          %1238 = vmatmul.bf16.gmra.mxu0 %v860
          %v1239 = vpop.f32.mrf.mxu0
          %v1240 = vadd.f32 %v1221, %v1239
          %v1241 = vpop.f32.mrf.mxu0
          %v1242 = vadd.f32 %v1223, %v1241
          %1243 = vmatmul.bf16.gmra.mxu0 %v865
          %v1244 = vpop.f32.mrf.mxu0
          %v1245 = vadd.f32 %v1226, %v1244
          %v1246 = vpop.f32.mrf.mxu0
          %v1247 = vadd.f32 %v1228, %v1246
          %1248 = vdwg.mxu0
          %1249 = vmatpush.bf16.msra.mxu0 %v1143
          %1250 = vmatpush.bf16.msra.mxu0 %v1142
          %1251 = vmatpush.bf16.msra.mxu0 %v1141
          %1252 = vmatpush.bf16.msra.mxu0 %v1140
          %1253 = vmatpush.bf16.msra.mxu0 %v1139
          %1254 = vmatpush.bf16.msra.mxu0 %v1138
          %1255 = vmatpush.bf16.msra.mxu0 %v1137
          %1256 = vmatpush.bf16.msra.mxu0 %v1136
          %1257 = vmatmul.bf16.gmra.mxu0 %v861
          %v1258 = vpop.f32.mrf.mxu0
          %v1259 = vadd.f32 %v1240, %v1258
          %v1260 = vpop.f32.mrf.mxu0
          %v1261 = vadd.f32 %v1242, %v1260
          %1262 = vmatmul.bf16.gmra.mxu0 %v866
          %v1263 = vpop.f32.mrf.mxu0
          %v1264 = vadd.f32 %v1245, %v1263
          %v1265 = vpop.f32.mrf.mxu0
          %v1266 = vadd.f32 %v1247, %v1265
          %1267 = vdwg.mxu0
          %1268 = vmatpush.bf16.msra.mxu0 %v1151
          %1269 = vmatpush.bf16.msra.mxu0 %v1150
          %1270 = vmatpush.bf16.msra.mxu0 %v1149
          %1271 = vmatpush.bf16.msra.mxu0 %v1148
          %1272 = vmatpush.bf16.msra.mxu0 %v1147
          %1273 = vmatpush.bf16.msra.mxu0 %v1146
          %1274 = vmatpush.bf16.msra.mxu0 %v1145
          %1275 = vmatpush.bf16.msra.mxu0 %v1144
          %1276 = vmatmul.bf16.gmra.mxu0 %v862
          %v1277 = vpop.f32.mrf.mxu0
          %v1278 = vadd.f32 %v1259, %v1277
          %v1279 = vpop.f32.mrf.mxu0
          %v1280 = vadd.f32 %v1261, %v1279
          %1281 = vmatmul.bf16.gmra.mxu0 %v867
          %v1282 = vpop.f32.mrf.mxu0
          %v1283 = vadd.f32 %v1264, %v1282
          %v1284 = vpop.f32.mrf.mxu0
          %v1285 = vadd.f32 %v1266, %v1284
          %1286 = vdwg.mxu0
          %v1287 = vmax.f32 %v1278, 0.0
          %v1288 = vmax.f32 %v1280, 0.0
          %v1289 = vmax.f32 %v1283, 0.0
          %v1290 = vmax.f32 %v1285, 0.0
          %1291 = vst [vmem:[#allocation11] sm:$0xff] %v1287
          %1292 = vst [vmem:[#allocation11 + $0x8] sm:$0xff] %v1288
          %1293 = vst [vmem:[#allocation11 + $0x10] sm:$0xff] %v1289
          %1294 = vst [vmem:[#allocation11 + $0x18] sm:$0xff] %v1290
        $region64: #{tpu_custom_call.1} parent=39 // pred_fallthru
          _
        // Predicated region
        $region65: #{tpu_custom_call.1} parent=39 // pred_check
          %p1295 = pneg %p171
        $region66: #{tpu_custom_call.1} parent=39 // pred_check_branch
          %1297 = sbr.rel (%p1295) target = $region68
        $region67: #{tpu_custom_call.1} parent=39 // pred_region
          %s1298 = smul.u32 4, %s28
          %1300 = vsyncadd [#allocation5], 0
          %s1301 = smul.addr %s1298, 8
          %s1302 = scalar_lea.hbm %s5, %s1301
          %s1303 = sshll.u32 [#allocation11], 4
          %s1304 = int_to_ptr.vmem [resolvable:$true] %s1303
          %s1305 = sshll.u32 %s1302, 4
          %s1306 = int_to_ptr.hbm [resolvable:$true] %s1305
          %1311 = dma.vmem_to_hbm [thread:$0]  %s1304, 512, %s1306, [#allocation5], 128, 128, 8
        $region68: #{tpu_custom_call.1} parent=39 // pred_fallthru
          _
        // Predicated region
        $region69: #{tpu_custom_call.1} parent=39 // pred_check
          %p1312 = pneg %p171
        $region70: #{tpu_custom_call.1} parent=39 // pred_check_branch
          %1314 = sbr.rel (%p1312) target = $region72
        $region71: #{tpu_custom_call.1} parent=39 // pred_region
          %1316 = dma.done [#allocation5], 512
        $region72: #{tpu_custom_call.1} parent=39 // pred_fallthru
          _
      $region40: #{tpu_custom_call.1} parent=5 // pred_fallthru
        _
      %p1317 = scmp.le.s32.totalorder 2, %s19
      // Predicated region
      $region73: #{tpu_custom_call.1} parent=5 // pred_check
        %p1318 = pneg %p1317
      $region74: #{tpu_custom_call.1} parent=5 // pred_check_branch
        %1320 = sbr.rel (%p1318) target = $region76
      $region75: #{tpu_custom_call.1} parent=5 // pred_region
        %s1321 = ssub.s32 %s19, 2
      $region76: #{tpu_custom_call.1} parent=5 // pred_fallthru
        _
    $region6: #{tpu_custom_call.1} parent=1 // loop_footer
      %s23 = sadd.s32 1, %s19
    $region7: #{tpu_custom_call.1} parent=1 // loop_footer_branch
      %18 = sbr.rel target = $region3
    $region8: #{tpu_custom_call.1} parent=1 // loop_exit
      _
    %1322 = vsyncpa [#allocation4], 1
    %s1323 = scalar_lea.sflag [#allocation4], 1
    %1324 = vsyncpa %s1323, 1
    %1325 = vsyncpa [#allocation7], 1
    %s1326 = scalar_lea.sflag [#allocation7], 1
    %1327 = vsyncpa %s1326, 1
    %1328 = vsyncpa [#allocation10], 1
    %1329 = vsyncpa [#allocation5], 1
    %s1330 = scalar_lea.sflag [#allocation5], 1
    %1331 = vsyncpa %s1330, 1

</llo_original>
